<compile_context>
chip_gen: v7x
topology: tpu7x:2x2x1
jax: 0.10.0
libtpu: 0.0.40
codegen_flags: <defaults>
</compile_context>

<pallas_src>
import math

import jax
import jax.numpy as jnp
from jax.experimental import pallas as pl
from jax.experimental.pallas import tpu as pltpu


_TILE_BYTES = 2 * 1024 * 1024    # target bytes of x per tile (~85% HBM-roofline regime)
_VMEM_LIMIT = 32 * 1024 * 1024   # scoped-VMEM budget, safe on v5e/v6e/v7x


def _build_pe(max_seq_len: int, embed_dim: int) -> jnp.ndarray:
    """Deterministic sinusoidal PE table, shape (max_seq_len, embed_dim)."""
    assert embed_dim % 2 == 0, "embed_dim must be even (matches the PyTorch module)"
    position = jnp.arange(max_seq_len, dtype=jnp.float32)[:, None]             # (L, 1)
    div_term = jnp.exp(
        jnp.arange(0, embed_dim, 2, dtype=jnp.float32)
        * (-math.log(10000.0) / embed_dim)
    )                                                                           # (D/2,)
    pe = jnp.zeros((max_seq_len, embed_dim), dtype=jnp.float32)
    pe = pe.at[:, 0::2].set(jnp.sin(position * div_term))
    pe = pe.at[:, 1::2].set(jnp.cos(position * div_term))
    return pe


def _pick_tile(dim: int, align: int, cap: int) -> int:
    """Largest divisor of `dim` that is a multiple of `align` and <= cap.

    Falls back to `dim` itself (full extent, always a legal block dim) if no
    such divisor exists.
    """
    upper = min(dim, cap)
    start = upper - (upper % align)
    for t in range(start, 0, -align):
        if dim % t == 0:
            return t
    return dim


def _add_pe_kernel(x_ref, pe_ref, o_ref):
    # Either (1, TS, D) + (1, TS, D)  (lane-dense D path, shape-aligned add), or
    #        (TB, TC)   + (1, TC)     (flattened path, sublane broadcast of pe).
    o_ref[...] = x_ref[...] + pe_ref[...]


def positional_embedding_forward(x: jnp.ndarray, pe_full: jnp.ndarray) -> jnp.ndarray:
    """x: (B, S, D); pe_full: (max_seq_len, D). Returns x + pe[:S] (broadcast over B)."""
    B, S, D = x.shape
    if S > pe_full.shape[0]:
        raise ValueError(f"seq_len {S} exceeds max_seq_len {pe_full.shape[0]}")
    pe = pe_full[:S, :].astype(x.dtype)          # slice + dtype match: XLA glue
    itemsize = x.dtype.itemsize

    compiler_params = pltpu.CompilerParams(
        dimension_semantics=("parallel", "parallel"),
        vmem_limit_bytes=_VMEM_LIMIT,
    )

    if D % 128 == 0:
        # ---- lane-dense along D: keep (B, S, D); tile the sequence axis. ----
        row_cap = max(8, _TILE_BYTES // (D * itemsize))
        ts = _pick_tile(S, 8, row_cap)           # multiple of 8 dividing S, or S itself
        if ts % 8 == 0 or S * D * itemsize <= 4 * _TILE_BYTES:
            pe3 = pe.reshape(1, S, D)
            return pl.pallas_call(
                _add_pe_kernel,
                out_shape=jax.ShapeDtypeStruct((B, S, D), x.dtype),
                grid_spec=pltpu.PrefetchScalarGridSpec(
                    num_scalar_prefetch=0,
                    grid=(B, S // ts),
                    in_specs=[
                        pl.BlockSpec((1, ts, D), lambda b, s: (b, s, 0)),
                        pl.BlockSpec((1, ts, D), lambda b, s: (0, s, 0)),
                    ],
                    out_specs=pl.BlockSpec((1, ts, D), lambda b, s: (b, s, 0)),
                ),
                compiler_params=compiler_params,
            )(x, pe3)

    # ---- flattened path: (B, S*D) so the lane dim is a multiple of 128 whenever
    #      S*D is; otherwise it degrades to a single full-extent lane block. ----
    sd = S * D
    lane_cap = max(128, _TILE_BYTES // (8 * itemsize))
    tc = _pick_tile(sd, 128, lane_cap)
    row_cap = max(1, _TILE_BYTES // (tc * itemsize))
    tb = _pick_tile(B, 8, row_cap)               # multiple of 8 dividing B, or B itself
    if tb * tc * itemsize > 4 * _TILE_BYTES:
        # tb fell back to full B; re-derive the lane tile for the VMEM budget.
        tc = _pick_tile(sd, 128, max(128, (2 * _TILE_BYTES) // (tb * itemsize)))

    xf = x.reshape(B, sd)
    pef = pe.reshape(1, sd)
    out = pl.pallas_call(
        _add_pe_kernel,
        out_shape=jax.ShapeDtypeStruct((B, sd), x.dtype),
        grid_spec=pltpu.PrefetchScalarGridSpec(
            num_scalar_prefetch=0,
            grid=(B // tb, sd // tc),
            in_specs=[
                pl.BlockSpec((tb, tc), lambda i, j: (i, j)),
                pl.BlockSpec((1, tc), lambda i, j: (0, j)),
            ],
            out_specs=pl.BlockSpec((tb, tc), lambda i, j: (i, j)),
        ),
        compiler_params=compiler_params,
    )(xf, pef)
    return out.reshape(B, S, D)


if __name__ == "__main__":
    # Small shapes consistent with the module: batch=2, seq=8, embed_dim=32.
    max_seq_len = 16
    embed_dim = 32
    B, S = 2, 8

    key = jax.random.PRNGKey(0)
    x = jax.random.normal(key, (B, S, embed_dim), dtype=jnp.float32)
    pe_full = _build_pe(max_seq_len, embed_dim)

    out = positional_embedding_forward(x, pe_full)
    out = jax.block_until_ready(out)

    ref = x + pe_full[None, :S, :]
    assert out.shape == (B, S, embed_dim)
    assert jnp.allclose(out, ref, atol=1e-6, rtol=1e-6), "mismatch vs reference (flattened path)"

    # Also exercise the lane-dense (D % 128 == 0) path at a small shape.
    B2, S2, D2 = 2, 64, 128
    x2 = jax.random.normal(jax.random.PRNGKey(0), (B2, S2, D2), dtype=jnp.float32)
    pe_full2 = _build_pe(128, D2)
    out2 = jax.block_until_ready(positional_embedding_forward(x2, pe_full2))
    ref2 = x2 + pe_full2[None, :S2, :]
    assert jnp.allclose(out2, ref2, atol=1e-6, rtol=1e-6), "mismatch vs reference (3-D path)"

    print("KERNEL_OK")
</pallas_src>

<mosaic_0001>
module attributes {stable_mosaic.version = 11 : i64} {
  func.func @_add_pe_kernel(%arg0: i32, %arg1: i32, %arg2: memref<2x256xf32, #tpu.memory_space<vmem>>, %arg3: memref<1x256xf32, #tpu.memory_space<vmem>>, %arg4: memref<2x256xf32, #tpu.memory_space<vmem>>) attributes {dimension_semantics = [#tpu.dimension_semantics<parallel>, #tpu.dimension_semantics<parallel>], iteration_bounds = array<i64: 1, 1>, scalar_prefetch = 0 : i64, scratch_operands = 0 : i64, tpu.core_type = #tpu.core_type<tc>, window_params = [{transform_indices = @transform_0, window_bounds = array<i64: 2, 256>}, {transform_indices = @transform_1, window_bounds = array<i64: 1, 256>}, {transform_indices = @transform_2, window_bounds = array<i64: 2, 256>}]} {
    %c0 = arith.constant 0 : index
    %c0_0 = arith.constant 0 : index
    %0 = vector.load %arg2[%c0, %c0_0] : memref<2x256xf32, #tpu.memory_space<vmem>>, vector<2x256xf32>
    %c0_1 = arith.constant 0 : index
    %c0_2 = arith.constant 0 : index
    %1 = vector.load %arg3[%c0_1, %c0_2] : memref<1x256xf32, #tpu.memory_space<vmem>>, vector<1x256xf32>
    %2 = vector.broadcast %1 : vector<1x256xf32> to vector<2x256xf32>
    %3 = arith.addf %0, %2 : vector<2x256xf32>
    %c0_3 = arith.constant 0 : index
    %c0_4 = arith.constant 0 : index
    %4 = vector.load %arg4[%c0_3, %c0_4] : memref<2x256xf32, #tpu.memory_space<vmem>>, vector<2x256xf32>
    tpu.vector_store %arg4[%c0_3, %c0_4], %3 {strides = array<i32>} : memref<2x256xf32, #tpu.memory_space<vmem>>, vector<2x256xf32>,
    return
  }
  func.func @transform_0(%arg0: i32, %arg1: i32) -> (i32, i32) {
    %c0_i32 = arith.constant 0 : i32
    return %arg0, %arg1 : i32, i32
  }
  func.func @transform_1(%arg0: i32, %arg1: i32) -> (i32, i32) {
    %c0_i32 = arith.constant 0 : i32
    %c0_i32_0 = arith.constant 0 : i32
    return %c0_i32, %arg1 : i32, i32
  }
  func.func @transform_2(%arg0: i32, %arg1: i32) -> (i32, i32) {
    %c0_i32 = arith.constant 0 : i32
    return %arg0, %arg1 : i32, i32
  }
}

</mosaic_0001>

<llo_original>
// kernel: tpu_custom_call.1
$region0: #{tpu_custom_call.1}
  #allocation0 [shape = 'u32[]', space=smem, size = 0x4, offset = 0x4, fixed_abs, tag = 'smem constant byte address 0x4 - core index']
  #allocation1 [shape = 'u32[144,128]{1,0:T(1,128)}', space=vmem, size = 0x12000, scoped, tag = 'internal scratch']
  %s0 = inlined_call_operand.hbm [shape: f32[2,256], index: 0, kind: input, shape index: {}]
  %s1 = inlined_call_operand.vmem [shape: f32[1,256], index: 1, kind: input, shape index: {}]
  %s2 = inlined_call_operand.hbm [shape: f32[2,256], index: 2, kind: output, shape index: {}]
  %s3 = sld [smem:[#allocation0]]
  $region22: #{tpu_custom_call.1} parent=0
    _
  %s5 = ssub.s32 1, %s3
  %s6 = scalar_select 0, %s5, %s3
  $region1: #{tpu_custom_call.1} parent=0
    #allocation2 [shape = 'u8[2048]{0}', space=vmem, size = 0x800, scoped, tag = 'input window, operand 0, single buffered']
    #allocation3 [shape = 's32[1]{0}', space=sflag, size = 0x4, scoped, tag = 'scoped memory for tpu_custom_call.1']
    #allocation4 [shape = 's32[1]{0}', space=sflag, size = 0x4, scoped, tag = 'scoped memory for tpu_custom_call.1']
    #allocation5 [shape = 'u8[2048]{0}', space=vmem, size = 0x800, scoped, tag = 'output window, operand 0, single buffered']
    %7 = vsyncpa [#allocation3], 0
    %8 = vsyncpa [#allocation4], 0
    // Predicated region
    $region2: #{tpu_custom_call.1} parent=1 // pred_check
      _
    $region3: #{tpu_custom_call.1} parent=1 // pred_check_branch
      %10 = sbr.rel (0) target = $region5
    $region4: #{tpu_custom_call.1} parent=1 // pred_region
      %s12 = ssub.s32 64, 64
      %13 = vsyncadd [#allocation3], %s12
      %s15 = sshll.u32 [#allocation2], 4
      %s16 = int_to_ptr.vmem [resolvable:$true] %s15
      %18 = dma.hbm_to_vmem [thread:$0]  %s0, 64, %s16, [#allocation3]
    $region5: #{tpu_custom_call.1} parent=1 // pred_fallthru
      _
    // Predicated region
    $region6: #{tpu_custom_call.1} parent=1 // pred_check
      _
    $region7: #{tpu_custom_call.1} parent=1 // pred_check_branch
      %20 = sbr.rel (0) target = $region9
    $region8: #{tpu_custom_call.1} parent=1 // pred_region
      _
    $region9: #{tpu_custom_call.1} parent=1 // pred_fallthru
      _
    // Predicated region
    $region10: #{tpu_custom_call.1} parent=1 // pred_check
      _
    $region11: #{tpu_custom_call.1} parent=1 // pred_check_branch
      %22 = sbr.rel (0) target = $region13
    $region12: #{tpu_custom_call.1} parent=1 // pred_region
      %23 = dma.done [#allocation3], 64
    $region13: #{tpu_custom_call.1} parent=1 // pred_fallthru
      _
    %v24 = vld [vmem:[#allocation2] sm:$0xf]
    %v25 = vld [vmem:[%s1] sm:$0x3]
    %v27 = vlaneseq
    %v28 = vshrl.u32 %v27, 7
    %v29 = vsub.s32 0, %v28
    %v30 = vrot.slane %v25, %v29
    %v31 = vlaneseq
    %v32 = vshrl.u32 %v31, 7
    %v33 = vsub.s32 1, %v32
    %v34 = vrot.slane %v25, %v33
    %v35 = vcombine.low %v30, %v34
    %v37 = vunpack.c.l.s4 1983009808
    %v38 = vunpack.c.0.s8 %v37
    %v39 = vlaneseq
    %v40 = vshrl.u32 %v39, 7
    %v41 = vsub.s32 %v38, %v40
    %v42 = vrot.slane %v35, %v41
    %v44 = vadd.f32 %v24, %v42
    %45 = vst [vmem:[#allocation5] sm:$0xf] %v44
    // Predicated region
    $region14: #{tpu_custom_call.1} parent=1 // pred_check
      _
    $region15: #{tpu_custom_call.1} parent=1 // pred_check_branch
      %47 = sbr.rel (0) target = $region17
    $region16: #{tpu_custom_call.1} parent=1 // pred_region
      %s49 = ssub.s32 64, 64
      %50 = vsyncadd [#allocation4], %s49
      %s52 = sshll.u32 [#allocation5], 4
      %s53 = int_to_ptr.vmem [resolvable:$true] %s52
      %55 = dma.vmem_to_hbm [thread:$0]  %s53, 64, %s2, [#allocation4]
    $region17: #{tpu_custom_call.1} parent=1 // pred_fallthru
      _
    // Predicated region
    $region18: #{tpu_custom_call.1} parent=1 // pred_check
      _
    $region19: #{tpu_custom_call.1} parent=1 // pred_check_branch
      %57 = sbr.rel (0) target = $region21
    $region20: #{tpu_custom_call.1} parent=1 // pred_region
      %58 = dma.done [#allocation4], 64
    $region21: #{tpu_custom_call.1} parent=1 // pred_fallthru
      _
    %59 = vsyncpa [#allocation3], 1
    %60 = vsyncpa [#allocation4], 1

</llo_original>
